<compile_context>
chip_gen: v7x
topology: tpu7x:2x2x1
jax: 0.10.0
libtpu: 0.0.40
codegen_flags: <defaults>
</compile_context>

<pallas_src>
import math

import jax
import jax.numpy as jnp
from jax.experimental import pallas as pl
from jax.experimental.pallas import tpu as pltpu


def _pick_tile(dim, candidates):
    """Largest candidate that evenly divides `dim`; else the full dim."""
    for c in candidates:
        if dim >= c and dim % c == 0:
            return c
    return dim


# --------------------------------------------------------------------------
# Kernel 1: dense / linear layer  y = x @ W + b   (W stored (in, out)).
# (M, N, K)-tiled grid, K-reduction last, f32 VMEM accumulator.
# --------------------------------------------------------------------------
def _linear_kernel(x_ref, w_ref, b_ref, o_ref, acc_ref):
    k = pl.program_id(2)

    @pl.when(k == 0)
    def _():
        acc_ref[...] = jnp.zeros_like(acc_ref)

    acc_ref[...] += jnp.dot(x_ref[...], w_ref[...],
                            preferred_element_type=jnp.float32)

    @pl.when(k == pl.num_programs(2) - 1)
    def _():
        o_ref[...] = (acc_ref[...] + b_ref[...]).astype(o_ref.dtype)


def pallas_linear(x2d, w, b, *, compute_dtype=jnp.float32,
                  out_dtype=jnp.float32):
    m, din = x2d.shape
    dout = w.shape[1]

    # bf16 MXU-operand fast path: cast ONCE in the wrapper (halves operand DMA,
    # avoids re-casting the same weight block on every (i, k) grid step).
    if jnp.dtype(compute_dtype) == jnp.dtype(jnp.bfloat16):
        if x2d.dtype != jnp.bfloat16:
            x2d = x2d.astype(jnp.bfloat16)
        if w.dtype != jnp.bfloat16:
            w = w.astype(jnp.bfloat16)
    bias = b.astype(jnp.float32).reshape(1, dout)

    tm = _pick_tile(m, (1024, 512, 256, 128))
    tn = _pick_tile(dout, (512, 256, 128))
    tk = _pick_tile(din, (512, 256, 128))
    grid = (m // tm, dout // tn, din // tk)

    xsz = jnp.dtype(x2d.dtype).itemsize
    wsz = jnp.dtype(w.dtype).itemsize
    osz = jnp.dtype(out_dtype).itemsize
    cost = pl.CostEstimate(
        flops=2 * m * din * dout,
        transcendentals=0,
        bytes_accessed=m * din * xsz + din * dout * wsz + 4 * dout
        + m * dout * osz,
    )
    return pl.pallas_call(
        _linear_kernel,
        out_shape=jax.ShapeDtypeStruct((m, dout), out_dtype),
        grid=grid,
        in_specs=[
            pl.BlockSpec((tm, tk), lambda i, j, kk: (i, kk)),
            pl.BlockSpec((tk, tn), lambda i, j, kk: (kk, j)),
            pl.BlockSpec((1, tn), lambda i, j, kk: (0, j)),
        ],
        out_specs=pl.BlockSpec((tm, tn), lambda i, j, kk: (i, j)),
        scratch_shapes=[pltpu.VMEM((tm, tn), jnp.float32)],
        compiler_params=pltpu.CompilerParams(
            dimension_semantics=("parallel", "parallel", "arbitrary")),
        cost_estimate=cost,
    )(x2d, w, bias)


# --------------------------------------------------------------------------
# Kernel 2: scaled-dot-product attention, flash-style.
# Grid = (B, H, S//tq, S//tkv); online softmax with f32 m/l/acc VMEM scratch.
# --------------------------------------------------------------------------
def _make_flash_kernel(scale, with_mask, return_p):
    def kernel(*refs):
        q_ref, k_ref, v_ref = refs[:3]
        i = 3
        m_ref = None
        if with_mask:
            m_ref = refs[i]
            i += 1
        o_ref = refs[i]
        i += 1
        p_ref = None
        if return_p:
            p_ref = refs[i]
            i += 1
        m_sc, l_sc, acc_sc = refs[i], refs[i + 1], refs[i + 2]

        ki = pl.program_id(3)

        @pl.when(ki == 0)
        def _():
            m_sc[...] = jnp.full_like(m_sc, -jnp.inf)
            l_sc[...] = jnp.zeros_like(l_sc)
            acc_sc[...] = jnp.zeros_like(acc_sc)

        # (tq, d_k) x (tkv, d_k)^T -> (tq, tkv), f32 accumulation on the MXU.
        s = jax.lax.dot_general(q_ref[...], k_ref[...],
                                (((1,), (1,)), ((), ())),
                                preferred_element_type=jnp.float32)
        s = s * jnp.float32(scale)
        if with_mask:
            s = jnp.where(m_ref[...] == 0, jnp.float32(-1e9), s)

        m_prev = m_sc[...]
        m_new = jnp.maximum(m_prev, jnp.max(s, axis=-1, keepdims=True))
        alpha = jnp.exp(m_prev - m_new)
        p = jnp.exp(s - m_new)
        l_sc[...] = alpha * l_sc[...] + jnp.sum(p, axis=-1, keepdims=True)
        acc_sc[...] = alpha * acc_sc[...] + jax.lax.dot_general(
            p.astype(v_ref.dtype), v_ref[...],
            (((1,), (0,)), ((), ())),
            preferred_element_type=jnp.float32)
        m_sc[...] = m_new
        # TODO(synk): nn.Dropout(p_attn) with p>0 not implemented (p=0 here).

        @pl.when(ki == pl.num_programs(3) - 1)
        def _():
            inv_l = pl.reciprocal(l_sc[...], approx=True)
            o_ref[...] = (acc_sc[...] * inv_l).astype(o_ref.dtype)
            if return_p:
                # Exact: return_attn forces a single kv step (tkv == S).
                p_ref[...] = (p * inv_l).astype(p_ref.dtype)

    return kernel


def pallas_attention(q, k, v, *, mask=None, return_attn=False):
    b, h, s, d_k = q.shape
    scale = 1.0 / math.sqrt(d_k)

    tq = _pick_tile(s, (256, 128))
    tkv = s if return_attn else _pick_tile(s, (512, 256, 128))
    n_q, n_kv = s // tq, s // tkv

    inputs = [q, k, v]
    in_specs = [
        pl.BlockSpec((None, None, tq, d_k), lambda bb, hh, qi, ki: (bb, hh, qi, 0)),
        pl.BlockSpec((None, None, tkv, d_k), lambda bb, hh, qi, ki: (bb, hh, ki, 0)),
        pl.BlockSpec((None, None, tkv, d_k), lambda bb, hh, qi, ki: (bb, hh, ki, 0)),
    ]
    mask_bytes = 0
    if mask is not None:
        if mask.ndim == 2:
            # Shared (S, S) mask resident across the batch/head grid -> no
            # wrapper broadcast, B*H-fold less mask DMA than broadcasting.
            mask_arr = (mask != 0).astype(jnp.int32)
            in_specs.append(pl.BlockSpec((tq, tkv),
                                         lambda bb, hh, qi, ki: (qi, ki)))
            mask_bytes = s * s * 4
        else:
            mask_arr = (jnp.broadcast_to(mask, (b, s, s)) != 0).astype(jnp.int32)
            in_specs.append(pl.BlockSpec((None, tq, tkv),
                                         lambda bb, hh, qi, ki: (bb, qi, ki)))
            mask_bytes = b * s * s * 4
        inputs.append(mask_arr)

    ctx_shape = jax.ShapeDtypeStruct((b, h, s, d_k), q.dtype)
    ctx_spec = pl.BlockSpec((None, None, tq, d_k),
                            lambda bb, hh, qi, ki: (bb, hh, qi, 0))
    if return_attn:
        out_shape = (ctx_shape, jax.ShapeDtypeStruct((b, h, s, s), jnp.bfloat16))
        out_specs = (ctx_spec,
                     pl.BlockSpec((None, None, tq, tkv),
                                  lambda bb, hh, qi, ki: (bb, hh, qi, ki)))
    else:
        out_shape = ctx_shape
        out_specs = ctx_spec

    isz = jnp.dtype(q.dtype).itemsize
    cost = pl.CostEstimate(
        flops=4 * b * h * s * s * d_k + 8 * b * h * s * s,
        transcendentals=b * h * s * s + b * h * s,
        bytes_accessed=4 * b * h * s * d_k * isz + mask_bytes
        + (2 * b * h * s * s if return_attn else 0),
    )
    return pl.pallas_call(
        _make_flash_kernel(scale, mask is not None, return_attn),
        out_shape=out_shape,
        grid=(b, h, n_q, n_kv),
        in_specs=in_specs,
        out_specs=out_specs,
        scratch_shapes=[pltpu.VMEM((tq, 1), jnp.float32),
                        pltpu.VMEM((tq, 1), jnp.float32),
                        pltpu.VMEM((tq, d_k), jnp.float32)],
        compiler_params=pltpu.CompilerParams(
            dimension_semantics=("parallel", "parallel", "parallel", "arbitrary"),
            vmem_limit_bytes=32 * 1024 * 1024),
        cost_estimate=cost,
    )(*inputs)


# --------------------------------------------------------------------------
# Kernel 3: DeCov / HSIC loss via the trace identity
#   sum_s trace((R K_s)(R K_s)) == sum_s ||Xc_s Xc_s^T||_F^2,
#   K_s = X_s^T X_s, X_s = x[:, s, :], Xc_s = X_s - mean_D(X_s).
# Per-position (B, B) Grams on the MXU (batch-dim-leading batched matmul),
# tiled over S with a resident scalar f32 accumulator.
# --------------------------------------------------------------------------
def _decov_kernel(xt_ref, o_ref, acc_ref):
    i = pl.program_id(0)

    @pl.when(i == 0)
    def _():
        acc_ref[...] = jnp.zeros_like(acc_ref)

    x = xt_ref[...].astype(jnp.float32)                    # (ts, B, D)
    xc = x - jnp.mean(x, axis=-1, keepdims=True)           # center over features
    g = jnp.einsum("sid,sjd->sij", xc, xc,
                   preferred_element_type=jnp.float32)     # (ts, B, B) on MXU
    part = jnp.sum(g * g, axis=2)                          # (ts, B)
    part = jnp.sum(part, axis=1, keepdims=True)            # (ts, 1)
    acc_ref[...] += jnp.sum(part, axis=0, keepdims=True)   # (1, 1)

    @pl.when(i == pl.num_programs(0) - 1)
    def _():
        o_ref[...] = acc_ref[...]


def _pick_seq_tile(s, bytes_per_pos, budget=4 << 20):
    for c in (512, 256, 128, 64, 32, 16, 8):
        if s % c == 0 and c * bytes_per_pos <= budget:
            return c
    return s


def pallas_decov(xt):
    s, b, d = xt.shape
    isz = jnp.dtype(xt.dtype).itemsize
    ts = _pick_seq_tile(s, b * d * isz + b * b * 4)
    cost = pl.CostEstimate(
        flops=2 * s * b * b * d + 2 * s * b * b + 3 * s * b * d,
        transcendentals=0,
        bytes_accessed=s * b * d * isz + 4,
    )
    out = pl.pallas_call(
        _decov_kernel,
        out_shape=jax.ShapeDtypeStruct((1, 1), jnp.float32),
        grid=(s // ts,),
        in_specs=[pl.BlockSpec((ts, b, d), lambda i: (i, 0, 0))],
        out_specs=pl.BlockSpec((1, 1), lambda i: (0, 0)),
        scratch_shapes=[pltpu.VMEM((1, 1), jnp.float32)],
        compiler_params=pltpu.CompilerParams(
            dimension_semantics=("arbitrary",),
            vmem_limit_bytes=32 * 1024 * 1024),
        cost_estimate=cost,
    )(xt)
    # 1e-9 scale applied once at the end (accumulate unscaled).
    return out[0, 0] * jnp.float32(1e-9)


# --------------------------------------------------------------------------
# Module wrapper
# --------------------------------------------------------------------------
def init_params(key, d_model):
    kw1, kb1, kw2, kb2 = jax.random.split(key, 4)
    lim = 1.0 / math.sqrt(d_model)
    # Fused QKV weight: columns ordered [wq | wk | wv], each (d_model, d_model).
    wqkv = jax.random.uniform(kw1, (d_model, 3 * d_model), jnp.float32, -lim, lim)
    bqkv = jax.random.uniform(kb1, (3 * d_model,), jnp.float32, -lim, lim)
    wo = jax.random.uniform(kw2, (d_model, d_model), jnp.float32, -lim, lim)
    bo = jax.random.uniform(kb2, (d_model,), jnp.float32, -lim, lim)
    return {"wqkv": (wqkv, bqkv), "wo": (wo, bo)}


def multi_headed_attention(params, query, key, value, h, mask=None,
                           compute_dtype=jnp.bfloat16, return_attn=False):
    b, s, d_model = query.shape
    assert d_model % h == 0
    d_k = d_model // h
    wqkv, bqkv = params["wqkv"]
    wo, bo = params["wo"]
    interm = jnp.dtype(compute_dtype)     # dtype of q/k/v/ctx intermediates

    def to_heads(y2d):
        return y2d.reshape(b, s, h, d_k).transpose(0, 2, 1, 3)   # (B, H, S, d_k)

    if (query is key) and (key is value):
        # Fused QKV projection: one matmul, activation read from HBM once.
        qkv = pallas_linear(query.reshape(b * s, d_model), wqkv, bqkv,
                            compute_dtype=compute_dtype, out_dtype=interm)
        qkv = qkv.reshape(b, s, 3, h, d_k).transpose(2, 0, 3, 1, 4)
        q, k, v = qkv[0], qkv[1], qkv[2]
    else:
        wq, wk, wv = jnp.split(wqkv, 3, axis=1)
        bq, bk, bv = jnp.split(bqkv, 3)
        q = to_heads(pallas_linear(query.reshape(b * s, d_model), wq, bq,
                                   compute_dtype=compute_dtype, out_dtype=interm))
        k = to_heads(pallas_linear(key.reshape(b * s, d_model), wk, bk,
                                   compute_dtype=compute_dtype, out_dtype=interm))
        v = to_heads(pallas_linear(value.reshape(b * s, d_model), wv, bv,
                                   compute_dtype=compute_dtype, out_dtype=interm))

    res = pallas_attention(q, k, v, mask=mask, return_attn=return_attn)
    ctx, attn = (res if return_attn else (res, None))

    # (B, H, S, d_k) -> (B, S, d_model) for DeCov + output projection.
    x = ctx.transpose(0, 2, 1, 3).reshape(b, s, d_model)

    # Batch-leading per-position layout for the MXU Gram kernel.
    decov_loss = pallas_decov(x.transpose(1, 0, 2))

    out = pallas_linear(x.reshape(b * s, d_model), wo, bo,
                        compute_dtype=compute_dtype,
                        out_dtype=jnp.float32).reshape(b, s, d_model)
    return out, decov_loss, attn


# --------------------------------------------------------------------------
# Pure-JAX reference of the PyTorch forward (correctness check)
# --------------------------------------------------------------------------
def reference(params, query, key, value, h, mask=None):
    b, s, d = query.shape
    d_k = d // h
    hp = jax.lax.Precision.HIGHEST
    wqkv, bqkv = params["wqkv"]
    wo, bo = params["wo"]
    wq, wk, wv = jnp.split(wqkv, 3, axis=1)
    bq, bk, bv = jnp.split(bqkv, 3)

    def lin(x, w, bias):
        return jnp.dot(x, w, precision=hp) + bias

    def split(y):
        return jnp.transpose(y.reshape(b, s, h, d_k), (0, 2, 1, 3))

    q = split(lin(query, wq, bq))
    k = split(lin(key, wk, bk))
    v = split(lin(value, wv, bv))
    scores = jnp.einsum("bhqd,bhkd->bhqk", q, k, precision=hp) / math.sqrt(d_k)
    if mask is not None:
        m3 = mask if mask.ndim == 3 else jnp.broadcast_to(mask, (b, s, s))
        scores = jnp.where(m3[:, None, :, :] == 0, -1e9, scores)
    p = jax.nn.softmax(scores, axis=-1)
    ctx = jnp.einsum("bhqk,bhkd->bhqd", p, v, precision=hp)
    x = jnp.transpose(ctx, (0, 2, 1, 3)).reshape(b, s, d)

    R = jnp.eye(d, dtype=jnp.float32) - jnp.ones((d, d), jnp.float32) / d
    loss = jnp.float32(0.0)
    for i in range(s):
        emb = x[:, i, :].T
        K = jnp.dot(emb, emb.T, precision=hp)
        M = jnp.dot(R, K, precision=hp)
        loss = loss + 1e-9 * jnp.trace(jnp.dot(M, M, precision=hp))
    return lin(x, wo, bo), loss, p


if __name__ == "__main__":
    h, d_model = 4, 32
    B, S = 2, 8

    key0 = jax.random.PRNGKey(0)
    kp, kx, kk, kv = jax.random.split(key0, 4)
    params = init_params(kp, d_model)
    x_in = jax.random.normal(kx, (B, S, d_model), jnp.float32)
    key_in = jax.random.normal(kk, (B, S, d_model), jnp.float32)
    val_in = jax.random.normal(kv, (B, S, d_model), jnp.float32)

    # 1) f32 path, self-attention (fused QKV projection), attn probs returned.
    out, loss, attn = multi_headed_attention(
        params, x_in, x_in, x_in, h, compute_dtype=jnp.float32, return_attn=True)
    jax.block_until_ready((out, loss, attn))
    r_out, r_loss, r_attn = reference(params, x_in, x_in, x_in, h)
    assert out.shape == (B, S, d_model)
    assert attn.shape == (B, h, S, S)
    assert jnp.allclose(out, r_out, rtol=2e-2, atol=2e-3)
    assert jnp.allclose(attn.astype(jnp.float32), r_attn, rtol=2e-2, atol=5e-3)
    assert jnp.allclose(loss, r_loss, rtol=2e-2, atol=1e-9)

    # 2) f32 path, cross-attention (separate projections) with a shared causal mask.
    causal = jnp.tril(jnp.ones((S, S), jnp.float32))
    out_m, loss_m, _ = multi_headed_attention(
        params, x_in, key_in, val_in, h, mask=causal, compute_dtype=jnp.float32)
    r_out_m, r_loss_m, _ = reference(params, x_in, key_in, val_in, h, mask=causal)
    jax.block_until_ready((out_m, loss_m))
    assert jnp.allclose(out_m, r_out_m, rtol=2e-2, atol=2e-3)
    assert jnp.allclose(loss_m, r_loss_m, rtol=2e-2, atol=1e-9)

    # 3) bf16 MXU-operand fast path (default dtype), self-attention, unmasked.
    out_bf, loss_bf, _ = multi_headed_attention(params, x_in, x_in, x_in, h)
    jax.block_until_ready((out_bf, loss_bf))
    assert jnp.allclose(out_bf, r_out, rtol=5e-2, atol=3e-2)
    assert jnp.allclose(loss_bf, r_loss, rtol=2.5e-1, atol=1e-7)

    print("KERNEL_OK")
</pallas_src>

<mosaic_0001>
module attributes {stable_mosaic.version = 11 : i64} {
  func.func @_linear_kernel(%arg0: i32, %arg1: i32, %arg2: i32, %arg3: memref<16x32xf32, #tpu.memory_space<vmem>>, %arg4: memref<32x96xf32, #tpu.memory_space<vmem>>, %arg5: memref<1x96xf32, #tpu.memory_space<vmem>>, %arg6: memref<16x96xf32, #tpu.memory_space<vmem>>, %arg7: memref<16x96xf32, #tpu.memory_space<vmem>>) attributes {dimension_semantics = [#tpu.dimension_semantics<parallel>, #tpu.dimension_semantics<parallel>, #tpu.dimension_semantics<arbitrary>], iteration_bounds = array<i64: 1, 1, 1>, scalar_prefetch = 0 : i64, scratch_operands = 1 : i64, tpu.core_type = #tpu.core_type<tc>, window_params = [{transform_indices = @transform_0, window_bounds = array<i64: 16, 32>}, {transform_indices = @transform_1, window_bounds = array<i64: 32, 96>}, {transform_indices = @transform_2, window_bounds = array<i64: 1, 96>}, {transform_indices = @transform_3, window_bounds = array<i64: 16, 96>}]} {
    %c0_i32 = arith.constant 0 : i32
    %0 = arith.cmpi eq, %arg2, %c0_i32 : i32
    %1 = arith.extui %0 : i1 to i32
    %c0_i32_0 = arith.constant 0 : i32
    %2 = arith.cmpi ne, %1, %c0_i32_0 : i32
    scf.if %2 {
      %cst_10 = arith.constant 0.000000e+00 : f32
      %12 = vector.broadcast %cst_10 : f32 to vector<16x96xf32>
      %c0_11 = arith.constant 0 : index
      %c0_12 = arith.constant 0 : index
      %13 = vector.load %arg7[%c0_11, %c0_12] : memref<16x96xf32, #tpu.memory_space<vmem>>, vector<16x96xf32>
      tpu.vector_store %arg7[%c0_11, %c0_12], %12 {strides = array<i32>} : memref<16x96xf32, #tpu.memory_space<vmem>>, vector<16x96xf32>,
    } else {
    }
    %c0 = arith.constant 0 : index
    %c0_1 = arith.constant 0 : index
    %3 = vector.load %arg7[%c0, %c0_1] : memref<16x96xf32, #tpu.memory_space<vmem>>, vector<16x96xf32>
    %c0_2 = arith.constant 0 : index
    %c0_3 = arith.constant 0 : index
    %4 = vector.load %arg3[%c0_2, %c0_3] : memref<16x32xf32, #tpu.memory_space<vmem>>, vector<16x32xf32>
    %c0_4 = arith.constant 0 : index
    %c0_5 = arith.constant 0 : index
    %5 = vector.load %arg4[%c0_4, %c0_5] : memref<32x96xf32, #tpu.memory_space<vmem>>, vector<32x96xf32>
    %cst = arith.constant dense<0.000000e+00> : vector<16x96xf32>
    %6 = tpu.matmul %4, %5, %cst {dimension_numbers = #tpu.dot_dimension_numbers<[1], [0], [0], [1], [0, 0, 1, 1], [], []>} : vector<16x32xf32>, vector<32x96xf32>, vector<16x96xf32> -> vector<16x96xf32>
    %7 = arith.addf %3, %6 : vector<16x96xf32>
    %c0_6 = arith.constant 0 : index
    %c0_7 = arith.constant 0 : index
    %8 = vector.load %arg7[%c0_6, %c0_7] : memref<16x96xf32, #tpu.memory_space<vmem>>, vector<16x96xf32>
    tpu.vector_store %arg7[%c0_6, %c0_7], %7 {strides = array<i32>} : memref<16x96xf32, #tpu.memory_space<vmem>>, vector<16x96xf32>,
    %c0_i32_8 = arith.constant 0 : i32
    %9 = arith.cmpi eq, %arg2, %c0_i32_8 : i32
    %10 = arith.extui %9 : i1 to i32
    %c0_i32_9 = arith.constant 0 : i32
    %11 = arith.cmpi ne, %10, %c0_i32_9 : i32
    scf.if %11 {
      %c0_10 = arith.constant 0 : index
      %c0_11 = arith.constant 0 : index
      %12 = vector.load %arg7[%c0_10, %c0_11] : memref<16x96xf32, #tpu.memory_space<vmem>>, vector<16x96xf32>
      %c0_12 = arith.constant 0 : index
      %c0_13 = arith.constant 0 : index
      %13 = vector.load %arg5[%c0_12, %c0_13] : memref<1x96xf32, #tpu.memory_space<vmem>>, vector<1x96xf32>
      %14 = vector.broadcast %13 : vector<1x96xf32> to vector<16x96xf32>
      %15 = arith.addf %12, %14 : vector<16x96xf32>
      %c0_14 = arith.constant 0 : index
      %c0_15 = arith.constant 0 : index
      %16 = vector.load %arg6[%c0_14, %c0_15] : memref<16x96xf32, #tpu.memory_space<vmem>>, vector<16x96xf32>
      tpu.vector_store %arg6[%c0_14, %c0_15], %15 {strides = array<i32>} : memref<16x96xf32, #tpu.memory_space<vmem>>, vector<16x96xf32>,
    } else {
    }
    return
  }
  func.func @transform_0(%arg0: i32, %arg1: i32, %arg2: i32) -> (i32, i32) {
    %c0_i32 = arith.constant 0 : i32
    return %arg0, %arg2 : i32, i32
  }
  func.func @transform_1(%arg0: i32, %arg1: i32, %arg2: i32) -> (i32, i32) {
    %c0_i32 = arith.constant 0 : i32
    return %arg2, %arg1 : i32, i32
  }
  func.func @transform_2(%arg0: i32, %arg1: i32, %arg2: i32) -> (i32, i32) {
    %c0_i32 = arith.constant 0 : i32
    %c0_i32_0 = arith.constant 0 : i32
    return %c0_i32, %arg1 : i32, i32
  }
  func.func @transform_3(%arg0: i32, %arg1: i32, %arg2: i32) -> (i32, i32) {
    %c0_i32 = arith.constant 0 : i32
    return %arg0, %arg1 : i32, i32
  }
}

</mosaic_0001>

<llo_original>
// kernel: tpu_custom_call.1
$region0: #{tpu_custom_call.1}
  #allocation0 [shape = 'u32[]', space=smem, size = 0x4, offset = 0x4, fixed_abs, tag = 'smem constant byte address 0x4 - core index']
  #allocation1 [shape = 'u32[144,128]{1,0:T(1,128)}', space=vmem, size = 0x12000, scoped, tag = 'internal scratch']
  #allocation2 [shape = 'f32[16,96]{1,0:T(8,128)}', space=vmem, size = 0x2000, scoped, tag = 'scratch operand']
  %s0 = inlined_call_operand.hbm [shape: f32[16,32], index: 0, kind: input, shape index: {}]
  %s1 = inlined_call_operand.hbm [shape: f32[32,96], index: 1, kind: input, shape index: {}]
  %s2 = inlined_call_operand.vmem [shape: f32[1,96], index: 2, kind: input, shape index: {}]
  %s3 = inlined_call_operand.hbm [shape: f32[16,96], index: 3, kind: output, shape index: {}]
  %s4 = sld [smem:[#allocation0]]
  $region38: #{tpu_custom_call.1} parent=0
    _
  %s6 = ssub.s32 1, %s4
  %s7 = scalar_select 0, %s6, %s4
  $region1: #{tpu_custom_call.1} parent=0
    #allocation3 [shape = 'u8[8192]{0}', space=vmem, size = 0x2000, scoped, tag = 'input window, operand 0, single buffered']
    #allocation4 [shape = 's32[1]{0}', space=sflag, size = 0x4, scoped, tag = 'scoped memory for tpu_custom_call.1']
    #allocation5 [shape = 's32[1]{0}', space=sflag, size = 0x4, scoped, tag = 'scoped memory for tpu_custom_call.1']
    #allocation6 [shape = 'u8[16384]{0}', space=vmem, size = 0x4000, scoped, tag = 'input window, operand 1, single buffered']
    #allocation7 [shape = 's32[1]{0}', space=sflag, size = 0x4, scoped, tag = 'scoped memory for tpu_custom_call.1']
    #allocation8 [shape = 'u8[8192]{0}', space=vmem, size = 0x2000, scoped, tag = 'output window, operand 0, single buffered']
    %8 = vsyncpa [#allocation4], 0
    %9 = vsyncpa [#allocation7], 0
    %10 = vsyncpa [#allocation5], 0
    // Predicated region
    $region2: #{tpu_custom_call.1} parent=1 // pred_check
      _
    $region3: #{tpu_custom_call.1} parent=1 // pred_check_branch
      %12 = sbr.rel (0) target = $region5
    $region4: #{tpu_custom_call.1} parent=1 // pred_region
      %s14 = ssub.s32 256, 256
      %15 = vsyncadd [#allocation4], %s14
      %s16 = sshll.u32 [#allocation3], 4
      %s17 = int_to_ptr.vmem [resolvable:$true] %s16
      %22 = dma.hbm_to_vmem [thread:$0]  %s0, 256, %s17, [#allocation4], 128, 128, 8
    $region5: #{tpu_custom_call.1} parent=1 // pred_fallthru
      _
    // Predicated region
    $region6: #{tpu_custom_call.1} parent=1 // pred_check
      _
    $region7: #{tpu_custom_call.1} parent=1 // pred_check_branch
      %24 = sbr.rel (0) target = $region9
    $region8: #{tpu_custom_call.1} parent=1 // pred_region
      %s26 = ssub.s32 512, 512
      %27 = vsyncadd [#allocation7], %s26
      %s28 = sshll.u32 [#allocation6], 4
      %s29 = int_to_ptr.vmem [resolvable:$true] %s28
      %34 = dma.hbm_to_vmem [thread:$0]  %s1, 512, %s29, [#allocation7], 128, 128, 8
    $region9: #{tpu_custom_call.1} parent=1 // pred_fallthru
      _
    // Predicated region
    $region10: #{tpu_custom_call.1} parent=1 // pred_check
      _
    $region11: #{tpu_custom_call.1} parent=1 // pred_check_branch
      %36 = sbr.rel (0) target = $region13
    $region12: #{tpu_custom_call.1} parent=1 // pred_region
      _
    $region13: #{tpu_custom_call.1} parent=1 // pred_fallthru
      _
    // Predicated region
    $region14: #{tpu_custom_call.1} parent=1 // pred_check
      _
    $region15: #{tpu_custom_call.1} parent=1 // pred_check_branch
      %38 = sbr.rel (0) target = $region17
    $region16: #{tpu_custom_call.1} parent=1 // pred_region
      %39 = dma.done [#allocation4], 256
    $region17: #{tpu_custom_call.1} parent=1 // pred_fallthru
      _
    // Predicated region
    $region18: #{tpu_custom_call.1} parent=1 // pred_check
      _
    $region19: #{tpu_custom_call.1} parent=1 // pred_check_branch
      %41 = sbr.rel (0) target = $region21
    $region20: #{tpu_custom_call.1} parent=1 // pred_region
      %42 = dma.done [#allocation7], 512
    $region21: #{tpu_custom_call.1} parent=1 // pred_fallthru
      _
    %p43 = scmp.eq.s32.totalorder 0, 0
    // Predicated region
    $region22: #{tpu_custom_call.1} parent=1 // pred_check
      %p44 = pneg %p43
    $region23: #{tpu_custom_call.1} parent=1 // pred_check_branch
      %46 = sbr.rel (%p44) target = $region25
    $region24: #{tpu_custom_call.1} parent=1 // pred_region
      %vm47 = vcmask 785408
      %48 = vst.msk [vmem:[#allocation2] sm:$0xff] %vm47, 0.0
      %49 = vst.msk [vmem:[#allocation2 + $0x8] sm:$0xff] %vm47, 0.0
    $region25: #{tpu_custom_call.1} parent=1 // pred_fallthru
      _
    %v50 = vld [vmem:[#allocation2] sm:$0xff]
    %v51 = vld [vmem:[#allocation2 + $0x8] sm:$0xff]
    %v52 = vld [vmem:[#allocation3] sm:$0xff]
    %v53 = vld [vmem:[#allocation3 + $0x8] sm:$0xff]
    %v54 = vld [vmem:[#allocation6] sm:$0xff]
    %v55 = vld [vmem:[#allocation6 + $0x8] sm:$0xff]
    %v56 = vld [vmem:[#allocation6 + $0x10] sm:$0xff]
    %v57 = vld [vmem:[#allocation6 + $0x18] sm:$0xff]
    %vm58 = vcmask 261120
    %v60 = vsel %vm58, %v52, 0
    %v63 = vsel %vm58, %v53, 0
    %65 = vmatprep.subr.mxu0 0.0
    %66 = vmatpush1.msra.mxu0 %v54
    %67 = vmatprep.subr.mxu0 0.0
    %68 = vmatpush1.msra.mxu0 %v55
    %69 = vmatprep.subr.mxu0 0.0
    %70 = vmatpush1.msra.mxu0 %v56
    %71 = vmatprep.subr.mxu0 0.0
    %72 = vmatpush1.msra.mxu0 %v57
    %73 = vmatprep.subr.mxu0 0.0
    %74 = vmatpush1.msra.mxu0 0.0
    %75 = vmatprep.subr.mxu0 0.0
    %76 = vmatpush1.msra.mxu0 0.0
    %77 = vmatprep.subr.mxu0 0.0
    %78 = vmatpush1.msra.mxu0 0.0
    %79 = vmatprep.subr.mxu0 0.0
    %80 = vmatpush1.msra.mxu0 0.0
    %81 = vmatprep.subr.mxu0 0.0
    %82 = vmatpush1.msra.mxu0 0.0
    %83 = vmatprep.subr.mxu0 0.0
    %84 = vmatpush1.msra.mxu0 0.0
    %85 = vmatprep.subr.mxu0 0.0
    %86 = vmatpush1.msra.mxu0 0.0
    %87 = vmatprep.subr.mxu0 0.0
    %88 = vmatpush1.msra.mxu0 0.0
    %89 = vmatprep.subr.mxu0 0.0
    %90 = vmatpush1.msra.mxu0 0.0
    %91 = vmatprep.subr.mxu0 0.0
    %92 = vmatpush1.msra.mxu0 0.0
    %93 = vmatprep.subr.mxu0 0.0
    %94 = vmatpush1.msra.mxu0 0.0
    %95 = vmatprep.subr.mxu0 0.0
    %96 = vmatpush1.msra.mxu0 0.0
    %97 = vmatprep.subr.mxu0 0.0
    %98 = vmatpush1.msra.mxu0 0.0
    %99 = vmatprep.subr.mxu0 0.0
    %100 = vmatpush1.msra.mxu0 0.0
    %101 = vmatprep.subr.mxu0 0.0
    %102 = vmatpush1.msra.mxu0 0.0
    %103 = vmatprep.subr.mxu0 0.0
    %104 = vmatpush1.msra.mxu0 0.0
    %105 = vmatprep.subr.mxu0 0.0
    %106 = vmatpush1.msra.mxu0 0.0
    %107 = vmatprep.subr.mxu0 0.0
    %108 = vmatpush1.msra.mxu0 0.0
    %109 = vmatprep.subr.mxu0 0.0
    %110 = vmatpush1.msra.mxu0 0.0
    %111 = vmatprep.subr.mxu0 0.0
    %112 = vmatpush1.msra.mxu0 0.0
    %113 = vmatprep.subr.mxu0 0.0
    %114 = vmatpush1.msra.mxu0 0.0
    %115 = vmatprep.subr.mxu0 0.0
    %116 = vmatpush1.msra.mxu0 0.0
    %117 = vmatprep.subr.mxu0 0.0
    %118 = vmatpush1.msra.mxu0 0.0
    %119 = vmatprep.subr.mxu0 0.0
    %120 = vmatpush1.msra.mxu0 0.0
    %121 = vmatprep.subr.mxu0 0.0
    %122 = vmatpush1.msra.mxu0 0.0
    %123 = vmatprep.subr.mxu0 0.0
    %124 = vmatpush1.msra.mxu0 0.0
    %125 = vmatprep.subr.mxu0 0.0
    %126 = vmatpush1.msra.mxu0 0.0
    %127 = vmatprep.subr.mxu0 0.0
    %128 = vmatpush1.msra.mxu0 0.0
    %129 = vmatprep.mubr.f32.mxu0 0.0
    %130 = vmatmul.mubr.f32.gmra.mrb[0].mxu0 %v60
    %v131 = vpop.f32.mrb[0].mxu0
    %v132 = vadd.f32 0.0, %v131
    %v133 = vpop.f32.mrb[0].mxu0
    %134 = vmatprep.mubr.f32.mxu0 0.0
    %135 = vmatmul.mubr.f32.gmra.mrb[0].mxu0 %v63
    %v136 = vpop.f32.mrb[0].mxu0
    %v137 = vadd.f32 0.0, %v136
    %v138 = vpop.f32.mrb[0].mxu0
    %139 = vdwg.mxu0
    %v140 = vadd.f32 %v50, %v132
    %v141 = vadd.f32 %v51, %v137
    %vm142 = vcmask 785408
    %143 = vst.msk [vmem:[#allocation2] sm:$0xff] %vm142, %v140
    %144 = vst.msk [vmem:[#allocation2 + $0x8] sm:$0xff] %vm142, %v141
    // Predicated region
    $region26: #{tpu_custom_call.1} parent=1 // pred_check
      %p145 = pneg %p43
    $region27: #{tpu_custom_call.1} parent=1 // pred_check_branch
      %147 = sbr.rel (%p145) target = $region29
    $region28: #{tpu_custom_call.1} parent=1 // pred_region
      %v148 = vld [vmem:[#allocation2] sm:$0xff]
      %v149 = vld [vmem:[#allocation2 + $0x8] sm:$0xff]
      %v150 = vld [vmem:[%s2] sm:$0x1]
      %v152 = vlaneseq
      %v153 = vshrl.u32 %v152, 7
      %v154 = vsub.s32 0, %v153
      %v155 = vrot.slane %v150, %v154
      %v157 = vadd.f32 %v148, %v155
      %v158 = vadd.f32 %v149, %v155
      %159 = vst.msk [vmem:[#allocation8] sm:$0xff] %vm142, %v157
      %160 = vst.msk [vmem:[#allocation8 + $0x8] sm:$0xff] %vm142, %v158
    $region29: #{tpu_custom_call.1} parent=1 // pred_fallthru
      _
    // Predicated region
    $region30: #{tpu_custom_call.1} parent=1 // pred_check
      _
    $region31: #{tpu_custom_call.1} parent=1 // pred_check_branch
      %162 = sbr.rel (0) target = $region33
    $region32: #{tpu_custom_call.1} parent=1 // pred_region
      %s164 = ssub.s32 256, 256
      %165 = vsyncadd [#allocation5], %s164
      %s166 = sshll.u32 [#allocation8], 4
      %s167 = int_to_ptr.vmem [resolvable:$true] %s166
      %172 = dma.vmem_to_hbm [thread:$0]  %s167, 256, %s3, [#allocation5], 128, 128, 8
    $region33: #{tpu_custom_call.1} parent=1 // pred_fallthru
      _
    // Predicated region
    $region34: #{tpu_custom_call.1} parent=1 // pred_check
      _
    $region35: #{tpu_custom_call.1} parent=1 // pred_check_branch
      %174 = sbr.rel (0) target = $region37
    $region36: #{tpu_custom_call.1} parent=1 // pred_region
      %175 = dma.done [#allocation5], 256
    $region37: #{tpu_custom_call.1} parent=1 // pred_fallthru
      _
    %176 = vsyncpa [#allocation4], 1
    %177 = vsyncpa [#allocation7], 1
    %178 = vsyncpa [#allocation5], 1

</llo_original>
